<compile_context>
chip_gen: v7x
topology: tpu7x:2x2x1
jax: 0.10.0
libtpu: 0.0.40
codegen_flags: <defaults>
</compile_context>

<pallas_src>
import jax
import jax.numpy as jnp
from jax.experimental import pallas as pl
from jax.experimental.pallas import tpu as pltpu


def _round_up(n: int, m: int) -> int:
    return ((n + m - 1) // m) * m


def _vmem_budget_bytes() -> int:
    """Generation-aware scoped-VMEM budget (~3/4 of physical, >= 32 MiB)."""
    try:
        cap = int(pltpu.get_tpu_info().vmem_capacity_bytes)
    except Exception:
        cap = 64 * 1024 * 1024  # conservative (v7x-sized) fallback
    return max(32 * 1024 * 1024, (cap * 3) // 4)


def mlp_kernel(x_ref, w1_ref, b1_ref, w2_ref, b2_ref, y_ref, h_ref):
    # Layer 1: cast the streamed f32 x tile to bf16 (VPU, hidden under MXU), MXU matmul
    # with f32 accumulation; bias add + ReLU stay in f32 on the VPU.
    x = x_ref[...].astype(jnp.bfloat16)
    h = jnp.dot(x, w1_ref[...], preferred_element_type=jnp.float32)
    h = jnp.maximum(h + b1_ref[...], 0.0)            # b1 is (1, Hp): broadcasts over rows
    h_bf16 = h.astype(jnp.bfloat16)                  # quantize ONCE; stored and reused
    h_ref[...] = h_bf16 if h_ref.dtype == jnp.bfloat16 else h.astype(h_ref.dtype)
    # Layer 2: bf16 MXU matmul with f32 accumulation; bias in f32.
    y = jnp.dot(h_bf16, w2_ref[...], preferred_element_type=jnp.float32)
    y_ref[...] = y + b2_ref[...]


def prepare_mlp_params(w1, b1, w2, b2):
    """One-time lane-dense padding + bf16 cast of the weights (hoisted out of forward).

    w1: (in_dim, hidden), w2: (hidden, out_dim) -- already transposed vs. PyTorch's
    (out, in) storage, so the kernel computes y = x @ W + b (== x @ W_pt.T + b).
    """
    in_dim, hidden = w1.shape
    hidden2, out_dim = w2.shape
    assert hidden2 == hidden and b1.shape == (hidden,) and b2.shape == (out_dim,)

    hidden_p = _round_up(hidden, 128)   # lane-dense feature dims (unmasked vst)
    out_p = _round_up(out_dim, 128)

    w1_p = jnp.zeros((in_dim, hidden_p), jnp.bfloat16).at[:, :hidden].set(
        w1.astype(jnp.bfloat16))
    w2_p = jnp.zeros((hidden_p, out_p), jnp.bfloat16).at[:hidden, :out_dim].set(
        w2.astype(jnp.bfloat16))
    b1_p = jnp.zeros((1, hidden_p), jnp.float32).at[:, :hidden].set(
        b1.reshape(1, hidden).astype(jnp.float32))
    b2_p = jnp.zeros((1, out_p), jnp.float32).at[:, :out_dim].set(
        b2.reshape(1, out_dim).astype(jnp.float32))

    return dict(w1=w1_p, b1=b1_p, w2=w2_p, b2=b2_p,
                in_dim=in_dim, hidden=hidden, out_dim=out_dim,
                hidden_p=hidden_p, out_p=out_p)


def mlp_forward(x, params, *, block_m: int = 512, h_dtype=jnp.bfloat16):
    """x: (batch, *) any trailing shape; flattened like torch's x.view(B, -1).

    Returns (y_pred, h_1): (batch, out_dim) f32 and (batch, hidden) h_dtype (bf16 default).
    """
    in_dim, hidden, out_dim = params["in_dim"], params["hidden"], params["out_dim"]
    hidden_p, out_p = params["hidden_p"], params["out_p"]

    batch = x.shape[0]
    x2d = x.reshape(batch, -1).astype(jnp.float32)
    assert x2d.shape[1] == in_dim, (x2d.shape, in_dim)

    budget = _vmem_budget_bytes()

    # Batch tile: as large as the VMEM budget allows.  Streamed x/h/y tiles are
    # double-buffered; weights are resident (single-buffered) across grid steps.
    h_bytes = jnp.dtype(h_dtype).itemsize
    resident = 2 * (in_dim * hidden_p + hidden_p * out_p) + 4 * (hidden_p + out_p)
    streamed = lambda t: 2 * (t * in_dim * 4 + t * hidden_p * h_bytes + t * out_p * 4)
    tm = max(16, min(block_m, _round_up(batch, 16)))
    while tm > 16 and resident + streamed(tm) > (budget * 9) // 10:
        tm = max(16, _round_up(tm // 2, 16))
    # TODO(synk): if the single-buffered resident weights alone approach the VMEM budget
    # (very large in_dim/hidden), add a K-reduction grid axis with an f32 VMEM accumulator
    # (("parallel","arbitrary") semantics, pl.when init/finalize) instead of full-K blocks.

    steps = pl.cdiv(batch, tm)
    if steps > 1 and steps % 2 == 1:
        # v7x: prefer an even step count so the "parallel" batch axis balances over 2 TCs.
        tm_alt = max(16, _round_up(pl.cdiv(batch, steps + 1), 16))
        if pl.cdiv(batch, tm_alt) % 2 == 0:
            tm, steps = tm_alt, pl.cdiv(batch, tm_alt)

    def run(single_buffer_weights: bool):
        def resident_spec(shape):
            # Constant block index -> operand stays in VMEM across the whole grid.
            if single_buffer_weights:
                return pl.BlockSpec(shape, lambda i: (0, 0),
                                    pipeline_mode=pl.Buffered(1))
            return pl.BlockSpec(shape, lambda i: (0, 0))

        return pl.pallas_call(
            mlp_kernel,
            out_shape=(
                jax.ShapeDtypeStruct((batch, out_p), jnp.float32),
                jax.ShapeDtypeStruct((batch, hidden_p), h_dtype),
            ),
            grid=(steps,),                                      # ragged last block is fine
            in_specs=[
                pl.BlockSpec((tm, in_dim), lambda i: (i, 0)),   # x: streamed f32 tile
                resident_spec((in_dim, hidden_p)),              # W1 (bf16, resident)
                resident_spec((1, hidden_p)),                   # b1 (f32, resident)
                resident_spec((hidden_p, out_p)),               # W2 (bf16, resident)
                resident_spec((1, out_p)),                      # b2 (f32, resident)
            ],
            out_specs=(
                pl.BlockSpec((tm, out_p), lambda i: (i, 0)),    # y: lane-dense f32
                pl.BlockSpec((tm, hidden_p), lambda i: (i, 0)), # h: lane-dense bf16
            ),
            compiler_params=pltpu.CompilerParams(
                dimension_semantics=("parallel",),  # shard batch tiles across TCs (v7x)
                vmem_limit_bytes=int(budget),
            ),
        )(x2d, params["w1"], params["b1"], params["w2"], params["b2"])

    try:
        y_p, h_p = run(single_buffer_weights=True)
    except Exception:
        # Older jax / unsupported Buffered(1): fall back to default double-buffering.
        y_p, h_p = run(single_buffer_weights=False)

    # Strip feature-dim padding (batch is not padded: last grid block is masked).
    return y_p[:, :out_dim], h_p[:, :hidden]


def init_linear_params(key, in_features, out_features):
    """Deterministic init mimicking torch.nn.Linear's U(-1/sqrt(in), 1/sqrt(in))."""
    k_w, k_b = jax.random.split(key)
    bound = 1.0 / jnp.sqrt(jnp.float32(in_features))
    # Stored as (in, out) -- already transposed relative to PyTorch's (out, in).
    w = jax.random.uniform(k_w, (in_features, out_features), jnp.float32,
                           minval=-bound, maxval=bound)
    b = jax.random.uniform(k_b, (out_features,), jnp.float32,
                           minval=-bound, maxval=bound)
    return w, b


if __name__ == "__main__":
    # Small shapes: batch=16, input_dim=32 (flattened from 4x8), hidden=32, output_dim=16.
    batch, input_dim, num_neurons, output_dim = 16, 32, 32, 16

    key = jax.random.PRNGKey(0)
    k_x, k_l1, k_l2 = jax.random.split(key, 3)

    # Input shaped (16, 4, 8) so the flatten path is exercised: 4*8 = 32.
    x = jax.random.normal(k_x, (batch, 4, 8), dtype=jnp.float32)

    w1, b1 = init_linear_params(k_l1, input_dim, num_neurons)
    w2, b2 = init_linear_params(k_l2, num_neurons, output_dim)

    # One-time weight prep (pad + bf16 cast) -- hoisted out of the per-call path.
    params = prepare_mlp_params(w1, b1, w2, b2)
    jax.block_until_ready((params["w1"], params["b1"], params["w2"], params["b2"]))

    y_pred, h_1 = mlp_forward(x, params)
    jax.block_until_ready((y_pred, h_1))

    assert y_pred.shape == (batch, output_dim) and y_pred.dtype == jnp.float32
    assert h_1.shape == (batch, num_neurons) and h_1.dtype == jnp.bfloat16

    # Reference check in plain JAX (same math as the PyTorch forward), f32 reference.
    # bf16 matmul inputs / bf16 h with f32 accumulation -> loosened tolerance.
    x2d = x.reshape(batch, -1)
    h_ref = jnp.maximum(x2d @ w1 + b1, 0.0)
    y_ref = h_ref @ w2 + b2
    assert jnp.allclose(h_1.astype(jnp.float32), h_ref, atol=3e-2, rtol=3e-2), "hidden mismatch"
    assert jnp.allclose(y_pred, y_ref, atol=3e-2, rtol=3e-2), "output mismatch"

    print("KERNEL_OK")
</pallas_src>

<mosaic_0001>
module attributes {stable_mosaic.version = 11 : i64} {
  func.func @mlp_kernel(%arg0: i32, %arg1: memref<16x32xf32, #tpu.memory_space<vmem>>, %arg2: memref<32x128xbf16, #tpu.memory_space<vmem>>, %arg3: memref<1x128xf32, #tpu.memory_space<vmem>>, %arg4: memref<128x128xbf16, #tpu.memory_space<vmem>>, %arg5: memref<1x128xf32, #tpu.memory_space<vmem>>, %arg6: memref<16x128xf32, #tpu.memory_space<vmem>>, %arg7: memref<16x128xbf16, #tpu.memory_space<vmem>>) attributes {dimension_semantics = [#tpu.dimension_semantics<parallel>], iteration_bounds = array<i64: 1>, scalar_prefetch = 0 : i64, scratch_operands = 0 : i64, tpu.core_type = #tpu.core_type<tc>, window_params = [{transform_indices = @transform_0, window_bounds = array<i64: 16, 32>}, {pipeline_mode = #tpu.pipeline_mode<synchronous>, transform_indices = @transform_1, window_bounds = array<i64: 32, 128>}, {pipeline_mode = #tpu.pipeline_mode<synchronous>, transform_indices = @transform_2, window_bounds = array<i64: 1, 128>}, {pipeline_mode = #tpu.pipeline_mode<synchronous>, transform_indices = @transform_3, window_bounds = array<i64: 128, 128>}, {pipeline_mode = #tpu.pipeline_mode<synchronous>, transform_indices = @transform_4, window_bounds = array<i64: 1, 128>}, {transform_indices = @transform_5, window_bounds = array<i64: 16, 128>}, {transform_indices = @transform_6, window_bounds = array<i64: 16, 128>}]} {
    %c0 = arith.constant 0 : index
    %c0_0 = arith.constant 0 : index
    %0 = vector.load %arg1[%c0, %c0_0] : memref<16x32xf32, #tpu.memory_space<vmem>>, vector<16x32xf32>
    %1 = arith.truncf %0 : vector<16x32xf32> to vector<16x32xbf16>
    %c0_1 = arith.constant 0 : index
    %c0_2 = arith.constant 0 : index
    %2 = vector.load %arg2[%c0_1, %c0_2] : memref<32x128xbf16, #tpu.memory_space<vmem>>, vector<32x128xbf16>
    %cst = arith.constant dense<0.000000e+00> : vector<16x128xf32>
    %3 = tpu.matmul %1, %2, %cst {dimension_numbers = #tpu.dot_dimension_numbers<[1], [0], [0], [1], [0, 0, 1, 1], [], []>} : vector<16x32xbf16>, vector<32x128xbf16>, vector<16x128xf32> -> vector<16x128xf32>
    %c0_3 = arith.constant 0 : index
    %c0_4 = arith.constant 0 : index
    %4 = vector.load %arg3[%c0_3, %c0_4] : memref<1x128xf32, #tpu.memory_space<vmem>>, vector<1x128xf32>
    %5 = vector.broadcast %4 : vector<1x128xf32> to vector<16x128xf32>
    %6 = arith.addf %3, %5 : vector<16x128xf32>
    %cst_5 = arith.constant 0.000000e+00 : f32
    %7 = vector.broadcast %cst_5 : f32 to vector<16x128xf32>
    %8 = arith.maximumf %6, %7 : vector<16x128xf32>
    %9 = arith.truncf %8 : vector<16x128xf32> to vector<16x128xbf16>
    %c0_6 = arith.constant 0 : index
    %c0_7 = arith.constant 0 : index
    %10 = vector.load %arg7[%c0_6, %c0_7] : memref<16x128xbf16, #tpu.memory_space<vmem>>, vector<16x128xbf16>
    tpu.vector_store %arg7[%c0_6, %c0_7], %9 {strides = array<i32>} : memref<16x128xbf16, #tpu.memory_space<vmem>>, vector<16x128xbf16>,
    %c0_8 = arith.constant 0 : index
    %c0_9 = arith.constant 0 : index
    %11 = vector.load %arg4[%c0_8, %c0_9] : memref<128x128xbf16, #tpu.memory_space<vmem>>, vector<128x128xbf16>
    %cst_10 = arith.constant dense<0.000000e+00> : vector<16x128xf32>
    %12 = tpu.matmul %9, %11, %cst_10 {dimension_numbers = #tpu.dot_dimension_numbers<[1], [0], [0], [1], [0, 0, 1, 1], [], []>} : vector<16x128xbf16>, vector<128x128xbf16>, vector<16x128xf32> -> vector<16x128xf32>
    %c0_11 = arith.constant 0 : index
    %c0_12 = arith.constant 0 : index
    %13 = vector.load %arg5[%c0_11, %c0_12] : memref<1x128xf32, #tpu.memory_space<vmem>>, vector<1x128xf32>
    %14 = vector.broadcast %13 : vector<1x128xf32> to vector<16x128xf32>
    %15 = arith.addf %12, %14 : vector<16x128xf32>
    %c0_13 = arith.constant 0 : index
    %c0_14 = arith.constant 0 : index
    %16 = vector.load %arg6[%c0_13, %c0_14] : memref<16x128xf32, #tpu.memory_space<vmem>>, vector<16x128xf32>
    tpu.vector_store %arg6[%c0_13, %c0_14], %15 {strides = array<i32>} : memref<16x128xf32, #tpu.memory_space<vmem>>, vector<16x128xf32>,
    return
  }
  func.func @transform_0(%arg0: i32) -> (i32, i32) {
    %c0_i32 = arith.constant 0 : i32
    %c0_i32_0 = arith.constant 0 : i32
    return %arg0, %c0_i32 : i32, i32
  }
  func.func @transform_1(%arg0: i32) -> (i32, i32) {
    %c0_i32 = arith.constant 0 : i32
    %c0_i32_0 = arith.constant 0 : i32
    %c0_i32_1 = arith.constant 0 : i32
    return %c0_i32, %c0_i32_0 : i32, i32
  }
  func.func @transform_2(%arg0: i32) -> (i32, i32) {
    %c0_i32 = arith.constant 0 : i32
    %c0_i32_0 = arith.constant 0 : i32
    %c0_i32_1 = arith.constant 0 : i32
    return %c0_i32, %c0_i32_0 : i32, i32
  }
  func.func @transform_3(%arg0: i32) -> (i32, i32) {
    %c0_i32 = arith.constant 0 : i32
    %c0_i32_0 = arith.constant 0 : i32
    %c0_i32_1 = arith.constant 0 : i32
    return %c0_i32, %c0_i32_0 : i32, i32
  }
  func.func @transform_4(%arg0: i32) -> (i32, i32) {
    %c0_i32 = arith.constant 0 : i32
    %c0_i32_0 = arith.constant 0 : i32
    %c0_i32_1 = arith.constant 0 : i32
    return %c0_i32, %c0_i32_0 : i32, i32
  }
  func.func @transform_5(%arg0: i32) -> (i32, i32) {
    %c0_i32 = arith.constant 0 : i32
    %c0_i32_0 = arith.constant 0 : i32
    return %arg0, %c0_i32 : i32, i32
  }
  func.func @transform_6(%arg0: i32) -> (i32, i32) {
    %c0_i32 = arith.constant 0 : i32
    %c0_i32_0 = arith.constant 0 : i32
    return %arg0, %c0_i32 : i32, i32
  }
}

module attributes {stable_mosaic.version = 11 : i64} {
  func.func @mlp_kernel(%arg0: i32, %arg1: memref<16x32xf32, #tpu.memory_space<vmem>>, %arg2: memref<32x128xbf16, #tpu.memory_space<vmem>>, %arg3: memref<1x128xf32, #tpu.memory_space<vmem>>, %arg4: memref<128x128xbf16, #tpu.memory_space<vmem>>, %arg5: memref<1x128xf32, #tpu.memory_space<vmem>>, %arg6: memref<16x128xf32, #tpu.memory_space<vmem>>, %arg7: memref<16x128xbf16, #tpu.memory_space<vmem>>) attributes {dimension_semantics = [#tpu.dimension_semantics<parallel>], iteration_bounds = array<i64: 1>, scalar_prefetch = 0 : i64, scratch_operands = 0 : i64, tpu.core_type = #tpu.core_type<tc>, window_params = [{transform_indices = @transform_0, window_bounds = array<i64: 16, 32>}, {pipeline_mode = #tpu.pipeline_mode<synchronous>, transform_indices = @transform_1, window_bounds = array<i64: 32, 128>}, {pipeline_mode = #tpu.pipeline_mode<synchronous>, transform_indices = @transform_2, window_bounds = array<i64: 1, 128>}, {pipeline_mode = #tpu.pipeline_mode<synchronous>, transform_indices = @transform_3, window_bounds = array<i64: 128, 128>}, {pipeline_mode = #tpu.pipeline_mode<synchronous>, transform_indices = @transform_4, window_bounds = array<i64: 1, 128>}, {transform_indices = @transform_5, window_bounds = array<i64: 16, 128>}, {transform_indices = @transform_6, window_bounds = array<i64: 16, 128>}]} {
    %c0 = arith.constant 0 : index
    %c0_0 = arith.constant 0 : index
    %0 = vector.load %arg1[%c0, %c0_0] : memref<16x32xf32, #tpu.memory_space<vmem>>, vector<16x32xf32>
    %1 = arith.truncf %0 : vector<16x32xf32> to vector<16x32xbf16>
    %c0_1 = arith.constant 0 : index
    %c0_2 = arith.constant 0 : index
    %2 = vector.load %arg2[%c0_1, %c0_2] : memref<32x128xbf16, #tpu.memory_space<vmem>>, vector<32x128xbf16>
    %cst = arith.constant dense<0.000000e+00> : vector<16x128xf32>
    %3 = tpu.matmul %1, %2, %cst {dimension_numbers = #tpu.dot_dimension_numbers<[1], [0], [0], [1], [0, 0, 1, 1], [], []>} : vector<16x32xbf16>, vector<32x128xbf16>, vector<16x128xf32> -> vector<16x128xf32>
    %c0_3 = arith.constant 0 : index
    %c0_4 = arith.constant 0 : index
    %4 = vector.load %arg3[%c0_3, %c0_4] : memref<1x128xf32, #tpu.memory_space<vmem>>, vector<1x128xf32>
    %5 = vector.broadcast %4 : vector<1x128xf32> to vector<16x128xf32>
    %6 = arith.addf %3, %5 : vector<16x128xf32>
    %cst_5 = arith.constant 0.000000e+00 : f32
    %7 = vector.broadcast %cst_5 : f32 to vector<16x128xf32>
    %8 = arith.maximumf %6, %7 : vector<16x128xf32>
    %9 = arith.truncf %8 : vector<16x128xf32> to vector<16x128xbf16>
    %c0_6 = arith.constant 0 : index
    %c0_7 = arith.constant 0 : index
    %10 = vector.load %arg7[%c0_6, %c0_7] : memref<16x128xbf16, #tpu.memory_space<vmem>>, vector<16x128xbf16>
    tpu.vector_store %arg7[%c0_6, %c0_7], %9 {strides = array<i32>} : memref<16x128xbf16, #tpu.memory_space<vmem>>, vector<16x128xbf16>,
    %c0_8 = arith.constant 0 : index
    %c0_9 = arith.constant 0 : index
    %11 = vector.load %arg4[%c0_8, %c0_9] : memref<128x128xbf16, #tpu.memory_space<vmem>>, vector<128x128xbf16>
    %cst_10 = arith.constant dense<0.000000e+00> : vector<16x128xf32>
    %12 = tpu.matmul %9, %11, %cst_10 {dimension_numbers = #tpu.dot_dimension_numbers<[1], [0], [0], [1], [0, 0, 1, 1], [], []>} : vector<16x128xbf16>, vector<128x128xbf16>, vector<16x128xf32> -> vector<16x128xf32>
    %c0_11 = arith.constant 0 : index
    %c0_12 = arith.constant 0 : index
    %13 = vector.load %arg5[%c0_11, %c0_12] : memref<1x128xf32, #tpu.memory_space<vmem>>, vector<1x128xf32>
    %14 = vector.broadcast %13 : vector<1x128xf32> to vector<16x128xf32>
    %15 = arith.addf %12, %14 : vector<16x128xf32>
    %c0_13 = arith.constant 0 : index
    %c0_14 = arith.constant 0 : index
    %16 = vector.load %arg6[%c0_13, %c0_14] : memref<16x128xf32, #tpu.memory_space<vmem>>, vector<16x128xf32>
    tpu.vector_store %arg6[%c0_13, %c0_14], %15 {strides = array<i32>} : memref<16x128xf32, #tpu.memory_space<vmem>>, vector<16x128xf32>,
    return
  }
  func.func @transform_0(%arg0: i32) -> (i32, i32) {
    %c0_i32 = arith.constant 0 : i32
    %c0_i32_0 = arith.constant 0 : i32
    return %arg0, %c0_i32 : i32, i32
  }
  func.func @transform_1(%arg0: i32) -> (i32, i32) {
    %c0_i32 = arith.constant 0 : i32
    %c0_i32_0 = arith.constant 0 : i32
    %c0_i32_1 = arith.constant 0 : i32
    return %c0_i32, %c0_i32_0 : i32, i32
  }
  func.func @transform_2(%arg0: i32) -> (i32, i32) {
    %c0_i32 = arith.constant 0 : i32
    %c0_i32_0 = arith.constant 0 : i32
    %c0_i32_1 = arith.constant 0 : i32
    return %c0_i32, %c0_i32_0 : i32, i32
  }
  func.func @transform_3(%arg0: i32) -> (i32, i32) {
    %c0_i32 = arith.constant 0 : i32
    %c0_i32_0 = arith.constant 0 : i32
    %c0_i32_1 = arith.constant 0 : i32
    return %c0_i32, %c0_i32_0 : i32, i32
  }
  func.func @transform_4(%arg0: i32) -> (i32, i32) {
    %c0_i32 = arith.constant 0 : i32
    %c0_i32_0 = arith.constant 0 : i32
    %c0_i32_1 = arith.constant 0 : i32
    return %c0_i32, %c0_i32_0 : i32, i32
  }
  func.func @transform_5(%arg0: i32) -> (i32, i32) {
    %c0_i32 = arith.constant 0 : i32
    %c0_i32_0 = arith.constant 0 : i32
    return %arg0, %c0_i32 : i32, i32
  }
  func.func @transform_6(%arg0: i32) -> (i32, i32) {
    %c0_i32 = arith.constant 0 : i32
    %c0_i32_0 = arith.constant 0 : i32
    return %arg0, %c0_i32 : i32, i32
  }
}

</mosaic_0001>

<llo_original>
// kernel: tpu_custom_call.1
$region0: #{tpu_custom_call.1}
  #allocation0 [shape = 'u32[]', space=smem, size = 0x4, offset = 0x4, fixed_abs, tag = 'smem constant byte address 0x4 - core index']
  #allocation1 [shape = 'u32[144,128]{1,0:T(1,128)}', space=vmem, size = 0x12000, scoped, tag = 'internal scratch']
  %s0 = inlined_call_operand.hbm [shape: f32[16,32], index: 0, kind: input, shape index: {}]
  %s1 = inlined_call_operand.hbm [shape: bf16[32,128], index: 1, kind: input, shape index: {}]
  %s2 = inlined_call_operand.vmem [shape: f32[1,128], index: 2, kind: input, shape index: {}]
  %s3 = inlined_call_operand.hbm [shape: bf16[128,128], index: 3, kind: input, shape index: {}]
  %s4 = inlined_call_operand.vmem [shape: f32[1,128], index: 4, kind: input, shape index: {}]
  %s5 = inlined_call_operand.hbm [shape: f32[16,128], index: 5, kind: output, shape index: {0}]
  %s6 = inlined_call_operand.hbm [shape: bf16[16,128], index: 6, kind: output, shape index: {1}]
  %7 = xla_tuple %s5, %s6
  %s8 = sld [smem:[#allocation0]]
  $region50: #{tpu_custom_call.1} parent=0
    _
  %s10 = ssub.s32 1, %s8
  %s11 = scalar_select 0, %s10, %s8
  $region1: #{tpu_custom_call.1} parent=0
    #allocation2 [shape = 'u8[8192]{0}', space=vmem, size = 0x2000, scoped, tag = 'input window, operand 0, single buffered']
    #allocation3 [shape = 's32[1]{0}', space=sflag, size = 0x4, scoped, tag = 'scoped memory for tpu_custom_call.1']
    #allocation4 [shape = 's32[1]{0}', space=sflag, size = 0x4, scoped, tag = 'scoped memory for tpu_custom_call.1']
    #allocation5 [shape = 'u8[8192]{0}', space=vmem, size = 0x2000, scoped, tag = 'input window, operand 1, single buffered']
    #allocation6 [shape = 's32[1]{0}', space=sflag, size = 0x4, scoped, tag = 'scoped memory for tpu_custom_call.1']
    #allocation7 [shape = 'u8[32768]{0}', space=vmem, size = 0x8000, scoped, tag = 'input window, operand 3, single buffered']
    #allocation8 [shape = 'u8[8192]{0}', space=vmem, size = 0x2000, scoped, tag = 'output window, operand 0, single buffered']
    #allocation9 [shape = 'u8[4096]{0}', space=vmem, size = 0x1000, scoped, tag = 'output window, operand 1, single buffered']
    #allocation10 [shape = 's32[1]{0}', space=sflag, size = 0x4, scoped, tag = 'scoped memory for tpu_custom_call.1']
    %12 = vsyncpa [#allocation3], 0
    %13 = vsyncpa [#allocation6], 0
    %14 = vsyncpa [#allocation4], 0
    %15 = vsyncpa [#allocation10], 0
    // Predicated region
    $region2: #{tpu_custom_call.1} parent=1 // pred_check
      _
    $region3: #{tpu_custom_call.1} parent=1 // pred_check_branch
      %17 = sbr.rel (0) target = $region5
    $region4: #{tpu_custom_call.1} parent=1 // pred_region
      %s19 = ssub.s32 256, 256
      %20 = vsyncadd [#allocation3], %s19
      %s21 = sshll.u32 [#allocation2], 4
      %s22 = int_to_ptr.vmem [resolvable:$true] %s21
      %27 = dma.hbm_to_vmem [thread:$0]  %s0, 256, %s22, [#allocation3], 128, 128, 8
    $region5: #{tpu_custom_call.1} parent=1 // pred_fallthru
      _
    // Predicated region
    $region6: #{tpu_custom_call.1} parent=1 // pred_check
      _
    $region7: #{tpu_custom_call.1} parent=1 // pred_check_branch
      %29 = sbr.rel (0) target = $region9
    $region8: #{tpu_custom_call.1} parent=1 // pred_region
      %s31 = ssub.s32 256, 256
      %32 = vsyncadd [#allocation6], %s31
      %s33 = sshll.u32 [#allocation5], 4
      %s34 = int_to_ptr.vmem [resolvable:$true] %s33
      %39 = dma.hbm_to_vmem [thread:$0]  %s1, 256, %s34, [#allocation6], 64, 64, 4
    $region9: #{tpu_custom_call.1} parent=1 // pred_fallthru
      _
    // Predicated region
    $region10: #{tpu_custom_call.1} parent=1 // pred_check
      _
    $region11: #{tpu_custom_call.1} parent=1 // pred_check_branch
      %41 = sbr.rel (0) target = $region13
    $region12: #{tpu_custom_call.1} parent=1 // pred_region
      _
    $region13: #{tpu_custom_call.1} parent=1 // pred_fallthru
      _
    // Predicated region
    $region14: #{tpu_custom_call.1} parent=1 // pred_check
      _
    $region15: #{tpu_custom_call.1} parent=1 // pred_check_branch
      %43 = sbr.rel (0) target = $region17
    $region16: #{tpu_custom_call.1} parent=1 // pred_region
      %s45 = ssub.s32 1024, 1024
      %46 = vsyncadd [#allocation6], %s45
      %s47 = sshll.u32 [#allocation7], 4
      %s48 = int_to_ptr.vmem [resolvable:$true] %s47
      %53 = dma.hbm_to_vmem [thread:$0]  %s3, 1024, %s48, [#allocation6], 64, 64, 4
    $region17: #{tpu_custom_call.1} parent=1 // pred_fallthru
      _
    // Predicated region
    $region18: #{tpu_custom_call.1} parent=1 // pred_check
      _
    $region19: #{tpu_custom_call.1} parent=1 // pred_check_branch
      %55 = sbr.rel (0) target = $region21
    $region20: #{tpu_custom_call.1} parent=1 // pred_region
      _
    $region21: #{tpu_custom_call.1} parent=1 // pred_fallthru
      _
    // Predicated region
    $region22: #{tpu_custom_call.1} parent=1 // pred_check
      _
    $region23: #{tpu_custom_call.1} parent=1 // pred_check_branch
      %57 = sbr.rel (0) target = $region25
    $region24: #{tpu_custom_call.1} parent=1 // pred_region
      %58 = dma.done [#allocation3], 256
    $region25: #{tpu_custom_call.1} parent=1 // pred_fallthru
      _
    // Predicated region
    $region26: #{tpu_custom_call.1} parent=1 // pred_check
      _
    $region27: #{tpu_custom_call.1} parent=1 // pred_check_branch
      %60 = sbr.rel (0) target = $region29
    $region28: #{tpu_custom_call.1} parent=1 // pred_region
      %61 = dma.done [#allocation6], 256
    $region29: #{tpu_custom_call.1} parent=1 // pred_fallthru
      _
    // Predicated region
    $region30: #{tpu_custom_call.1} parent=1 // pred_check
      _
    $region31: #{tpu_custom_call.1} parent=1 // pred_check_branch
      %63 = sbr.rel (0) target = $region33
    $region32: #{tpu_custom_call.1} parent=1 // pred_region
      %64 = dma.done [#allocation6], 1024
    $region33: #{tpu_custom_call.1} parent=1 // pred_fallthru
      _
    %v66 = vld [vmem:[#allocation2] sm:$0xff]
    %v67 = vld [vmem:[#allocation2 + $0x8] sm:$0xff]
    %v68 = vpack.c.bf16 %v67, %v66
    %v69 = vld [vmem:[#allocation5] sm:$0xf]
    %v70 = vld [vmem:[#allocation5 + $0x4] sm:$0xf]
    %v71 = vld [vmem:[#allocation5 + $0x8] sm:$0xf]
    %v72 = vld [vmem:[#allocation5 + $0xc] sm:$0xf]
    %v73 = vld [vmem:[%s2] sm:$0x1]
    %v75 = vlaneseq
    %v76 = vshrl.u32 %v75, 7
    %v77 = vsub.s32 0, %v76
    %v78 = vrot.slane %v73, %v77
    %v84 = vunpack.c.l.b16 %v69
    %v85 = vunpack.c.l.b16 %v70
    %v86 = vunpack.c.l.b16 %v71
    %v87 = vunpack.c.l.b16 %v72
    %v88 = vpack.c.b16 %v85, %v84
    %v89 = vpack.c.b16 %v87, %v86
    %vm92 = vcmask 261120
    %v94 = vsel %vm92, %v68, 0
    %96 = vmatprep.subr.bf16.mxu0 0
    %97 = vmatpush1.bf16.msra.mxu0 %v88
    %98 = vmatprep.subr.bf16.mxu0 0
    %99 = vmatpush1.bf16.msra.mxu0 %v89
    %100 = vmatprep.subr.bf16.mxu0 0
    %101 = vmatpush1.bf16.msra.mxu0 0
    %102 = vmatprep.subr.bf16.mxu0 0
    %103 = vmatpush1.bf16.msra.mxu0 0
    %104 = vmatprep.subr.bf16.mxu0 0
    %105 = vmatpush1.bf16.msra.mxu0 0
    %106 = vmatprep.subr.bf16.mxu0 0
    %107 = vmatpush1.bf16.msra.mxu0 0
    %108 = vmatprep.subr.bf16.mxu0 0
    %109 = vmatpush1.bf16.msra.mxu0 0
    %110 = vmatprep.subr.bf16.mxu0 0
    %111 = vmatpush1.bf16.msra.mxu0 0
    %112 = vmatprep.subr.bf16.mxu0 0
    %113 = vmatpush1.bf16.msra.mxu0 0
    %114 = vmatprep.subr.bf16.mxu0 0
    %115 = vmatpush1.bf16.msra.mxu0 0
    %116 = vmatprep.subr.bf16.mxu0 0
    %117 = vmatpush1.bf16.msra.mxu0 0
    %118 = vmatprep.subr.bf16.mxu0 0
    %119 = vmatpush1.bf16.msra.mxu0 0
    %120 = vmatprep.subr.bf16.mxu0 0
    %121 = vmatpush1.bf16.msra.mxu0 0
    %122 = vmatprep.subr.bf16.mxu0 0
    %123 = vmatpush1.bf16.msra.mxu0 0
    %124 = vmatprep.subr.bf16.mxu0 0
    %125 = vmatpush1.bf16.msra.mxu0 0
    %126 = vmatprep.subr.bf16.mxu0 0
    %127 = vmatpush1.bf16.msra.mxu0 0
    %128 = vmatprep.mubr.bf16.mxu0 0
    %129 = vmatmul.mubr.bf16.gmra.mrb[0].mxu0 %v94
    %v130 = vpop.f32.mrb[0].mxu0
    %v131 = vadd.f32 %v78, %v130
    %v132 = vpop.f32.mrb[0].mxu0
    %v133 = vpop.f32.mrb[0].mxu0
    %v134 = vadd.f32 %v78, %v133
    %v135 = vpop.f32.mrb[0].mxu0
    %136 = vdwg.mxu0
    %v137 = vmax.f32 %v131, 0.0
    %v138 = vmax.f32 %v134, 0.0
    %v139 = vpack.c.bf16 %v138, %v137
    %v141 = vunpack.c.l.b16 %v139
    %v142 = vunpack.c.h.b16 %v139
    %v143 = vpack.c.b16 %v141, %v141
    %v144 = vpack.c.b16 %v142, %v142
    %147 = vst [vmem:[#allocation9] sm:$0xf] %v143
    %148 = vst [vmem:[#allocation9 + $0x4] sm:$0xf] %v144
    %v149 = vld [vmem:[#allocation7] sm:$0xf]
    %v150 = vld [vmem:[#allocation7 + $0x4] sm:$0xf]
    %v151 = vld [vmem:[#allocation7 + $0x8] sm:$0xf]
    %v152 = vld [vmem:[#allocation7 + $0xc] sm:$0xf]
    %v153 = vld [vmem:[#allocation7 + $0x10] sm:$0xf]
    %v154 = vld [vmem:[#allocation7 + $0x14] sm:$0xf]
    %v155 = vld [vmem:[#allocation7 + $0x18] sm:$0xf]
    %v156 = vld [vmem:[#allocation7 + $0x1c] sm:$0xf]
    %v157 = vld [vmem:[#allocation7 + $0x20] sm:$0xf]
    %v158 = vld [vmem:[#allocation7 + $0x24] sm:$0xf]
    %v159 = vld [vmem:[#allocation7 + $0x28] sm:$0xf]
    %v160 = vld [vmem:[#allocation7 + $0x2c] sm:$0xf]
    %v161 = vld [vmem:[#allocation7 + $0x30] sm:$0xf]
    %v162 = vld [vmem:[#allocation7 + $0x34] sm:$0xf]
    %v163 = vld [vmem:[#allocation7 + $0x38] sm:$0xf]
    %v164 = vld [vmem:[#allocation7 + $0x3c] sm:$0xf]
    %v165 = vld [vmem:[%s4] sm:$0x1]
    %v167 = vlaneseq
    %v168 = vshrl.u32 %v167, 7
    %v169 = vsub.s32 0, %v168
    %v170 = vrot.slane %v165, %v169
    %v188 = vunpack.c.l.b16 %v149
    %v189 = vunpack.c.l.b16 %v150
    %v190 = vunpack.c.l.b16 %v151
    %v191 = vunpack.c.l.b16 %v152
    %v192 = vunpack.c.l.b16 %v153
    %v193 = vunpack.c.l.b16 %v154
    %v194 = vunpack.c.l.b16 %v155
    %v195 = vunpack.c.l.b16 %v156
    %v196 = vunpack.c.l.b16 %v157
    %v197 = vunpack.c.l.b16 %v158
    %v198 = vunpack.c.l.b16 %v159
    %v199 = vunpack.c.l.b16 %v160
    %v200 = vunpack.c.l.b16 %v161
    %v201 = vunpack.c.l.b16 %v162
    %v202 = vunpack.c.l.b16 %v163
    %v203 = vunpack.c.l.b16 %v164
    %v204 = vpack.c.b16 %v189, %v188
    %v205 = vpack.c.b16 %v191, %v190
    %v206 = vpack.c.b16 %v193, %v192
    %v207 = vpack.c.b16 %v195, %v194
    %v208 = vpack.c.b16 %v197, %v196
    %v209 = vpack.c.b16 %v199, %v198
    %v210 = vpack.c.b16 %v201, %v200
    %v211 = vpack.c.b16 %v203, %v202
    %220 = vmatprep.subr.bf16.mxu0 0
    %221 = vmatpush1.bf16.msra.mxu0 %v204
    %222 = vmatprep.subr.bf16.mxu0 0
    %223 = vmatpush1.bf16.msra.mxu0 %v205
    %224 = vmatprep.subr.bf16.mxu0 0
    %225 = vmatpush1.bf16.msra.mxu0 %v206
    %226 = vmatprep.subr.bf16.mxu0 0
    %227 = vmatpush1.bf16.msra.mxu0 %v207
    %228 = vmatprep.subr.bf16.mxu0 0
    %229 = vmatpush1.bf16.msra.mxu0 %v208
    %230 = vmatprep.subr.bf16.mxu0 0
    %231 = vmatpush1.bf16.msra.mxu0 %v209
    %232 = vmatprep.subr.bf16.mxu0 0
    %233 = vmatpush1.bf16.msra.mxu0 %v210
    %234 = vmatprep.subr.bf16.mxu0 0
    %235 = vmatpush1.bf16.msra.mxu0 %v211
    %236 = vmatprep.subr.bf16.mxu0 0
    %237 = vmatpush1.bf16.msra.mxu0 0
    %238 = vmatprep.subr.bf16.mxu0 0
    %239 = vmatpush1.bf16.msra.mxu0 0
    %240 = vmatprep.subr.bf16.mxu0 0
    %241 = vmatpush1.bf16.msra.mxu0 0
    %242 = vmatprep.subr.bf16.mxu0 0
    %243 = vmatpush1.bf16.msra.mxu0 0
    %244 = vmatprep.subr.bf16.mxu0 0
    %245 = vmatpush1.bf16.msra.mxu0 0
    %246 = vmatprep.subr.bf16.mxu0 0
    %247 = vmatpush1.bf16.msra.mxu0 0
    %248 = vmatprep.subr.bf16.mxu0 0
    %249 = vmatpush1.bf16.msra.mxu0 0
    %250 = vmatprep.subr.bf16.mxu0 0
    %251 = vmatpush1.bf16.msra.mxu0 0
    %252 = vmatprep.mubr.bf16.mxu0 0
    %253 = vmatmul.mubr.bf16.gmra.mrb[0].mxu0 %v139
    %v254 = vpop.f32.mrb[0].mxu0
    %v255 = vadd.f32 %v170, %v254
    %v256 = vpop.f32.mrb[0].mxu0
    %v257 = vpop.f32.mrb[0].mxu0
    %v258 = vadd.f32 %v170, %v257
    %v259 = vpop.f32.mrb[0].mxu0
    %260 = vdwg.mxu0
    %261 = vst [vmem:[#allocation8] sm:$0xff] %v255
    %262 = vst [vmem:[#allocation8 + $0x8] sm:$0xff] %v258
    // Predicated region
    $region34: #{tpu_custom_call.1} parent=1 // pred_check
      _
    $region35: #{tpu_custom_call.1} parent=1 // pred_check_branch
      %264 = sbr.rel (0) target = $region37
    $region36: #{tpu_custom_call.1} parent=1 // pred_region
      %s266 = ssub.s32 256, 256
      %267 = vsyncadd [#allocation4], %s266
      %s268 = sshll.u32 [#allocation8], 4
      %s269 = int_to_ptr.vmem [resolvable:$true] %s268
      %274 = dma.vmem_to_hbm [thread:$0]  %s269, 256, %s5, [#allocation4], 128, 128, 8
    $region37: #{tpu_custom_call.1} parent=1 // pred_fallthru
      _
    // Predicated region
    $region38: #{tpu_custom_call.1} parent=1 // pred_check
      _
    $region39: #{tpu_custom_call.1} parent=1 // pred_check_branch
      %276 = sbr.rel (0) target = $region41
    $region40: #{tpu_custom_call.1} parent=1 // pred_region
      %s278 = ssub.s32 128, 128
      %279 = vsyncadd [#allocation10], %s278
      %s280 = sshll.u32 [#allocation9], 4
      %s281 = int_to_ptr.vmem [resolvable:$true] %s280
      %286 = dma.vmem_to_hbm [thread:$0]  %s281, 128, %s6, [#allocation10], 64, 64, 4
    $region41: #{tpu_custom_call.1} parent=1 // pred_fallthru
      _
    // Predicated region
    $region42: #{tpu_custom_call.1} parent=1 // pred_check
      _
    $region43: #{tpu_custom_call.1} parent=1 // pred_check_branch
      %288 = sbr.rel (0) target = $region45
    $region44: #{tpu_custom_call.1} parent=1 // pred_region
      %289 = dma.done [#allocation4], 256
    $region45: #{tpu_custom_call.1} parent=1 // pred_fallthru
      _
    // Predicated region
    $region46: #{tpu_custom_call.1} parent=1 // pred_check
      _
    $region47: #{tpu_custom_call.1} parent=1 // pred_check_branch
      %291 = sbr.rel (0) target = $region49
    $region48: #{tpu_custom_call.1} parent=1 // pred_region
      %292 = dma.done [#allocation10], 128
    $region49: #{tpu_custom_call.1} parent=1 // pred_fallthru
      _
    %293 = vsyncpa [#allocation3], 1
    %294 = vsyncpa [#allocation6], 1
    %295 = vsyncpa [#allocation4], 1
    %296 = vsyncpa [#allocation10], 1

// kernel: tpu_custom_call.1
$region0: #{tpu_custom_call.1}
  #allocation0 [shape = 'u32[]', space=smem, size = 0x4, offset = 0x4, fixed_abs, tag = 'smem constant byte address 0x4 - core index']
  #allocation1 [shape = 'u32[144,128]{1,0:T(1,128)}', space=vmem, size = 0x12000, scoped, tag = 'internal scratch']
  %s0 = inlined_call_operand.hbm [shape: f32[16,32], index: 0, kind: input, shape index: {}]
  %s1 = inlined_call_operand.hbm [shape: bf16[32,128], index: 1, kind: input, shape index: {}]
  %s2 = inlined_call_operand.vmem [shape: f32[1,128], index: 2, kind: input, shape index: {}]
  %s3 = inlined_call_operand.hbm [shape: bf16[128,128], index: 3, kind: input, shape index: {}]
  %s4 = inlined_call_operand.vmem [shape: f32[1,128], index: 4, kind: input, shape index: {}]
  %s5 = inlined_call_operand.hbm [shape: f32[16,128], index: 5, kind: output, shape index: {0}]
  %s6 = inlined_call_operand.hbm [shape: bf16[16,128], index: 6, kind: output, shape index: {1}]
  %7 = xla_tuple %s5, %s6
  %s8 = sld [smem:[#allocation0]]
  $region50: #{tpu_custom_call.1} parent=0
    _
  %s10 = ssub.s32 1, %s8
  %s11 = scalar_select 0, %s10, %s8
  $region1: #{tpu_custom_call.1} parent=0
    #allocation2 [shape = 'u8[8192]{0}', space=vmem, size = 0x2000, scoped, tag = 'input window, operand 0, single buffered']
    #allocation3 [shape = 's32[1]{0}', space=sflag, size = 0x4, scoped, tag = 'scoped memory for tpu_custom_call.1']
    #allocation4 [shape = 's32[1]{0}', space=sflag, size = 0x4, scoped, tag = 'scoped memory for tpu_custom_call.1']
    #allocation5 [shape = 'u8[8192]{0}', space=vmem, size = 0x2000, scoped, tag = 'input window, operand 1, single buffered']
    #allocation6 [shape = 's32[1]{0}', space=sflag, size = 0x4, scoped, tag = 'scoped memory for tpu_custom_call.1']
    #allocation7 [shape = 'u8[32768]{0}', space=vmem, size = 0x8000, scoped, tag = 'input window, operand 3, single buffered']
    #allocation8 [shape = 'u8[8192]{0}', space=vmem, size = 0x2000, scoped, tag = 'output window, operand 0, single buffered']
    #allocation9 [shape = 'u8[4096]{0}', space=vmem, size = 0x1000, scoped, tag = 'output window, operand 1, single buffered']
    #allocation10 [shape = 's32[1]{0}', space=sflag, size = 0x4, scoped, tag = 'scoped memory for tpu_custom_call.1']
    %12 = vsyncpa [#allocation3], 0
    %13 = vsyncpa [#allocation6], 0
    %14 = vsyncpa [#allocation4], 0
    %15 = vsyncpa [#allocation10], 0
    // Predicated region
    $region2: #{tpu_custom_call.1} parent=1 // pred_check
      _
    $region3: #{tpu_custom_call.1} parent=1 // pred_check_branch
      %17 = sbr.rel (0) target = $region5
    $region4: #{tpu_custom_call.1} parent=1 // pred_region
      %s19 = ssub.s32 256, 256
      %20 = vsyncadd [#allocation3], %s19
      %s21 = sshll.u32 [#allocation2], 4
      %s22 = int_to_ptr.vmem [resolvable:$true] %s21
      %27 = dma.hbm_to_vmem [thread:$0]  %s0, 256, %s22, [#allocation3], 128, 128, 8
    $region5: #{tpu_custom_call.1} parent=1 // pred_fallthru
      _
    // Predicated region
    $region6: #{tpu_custom_call.1} parent=1 // pred_check
      _
    $region7: #{tpu_custom_call.1} parent=1 // pred_check_branch
      %29 = sbr.rel (0) target = $region9
    $region8: #{tpu_custom_call.1} parent=1 // pred_region
      %s31 = ssub.s32 256, 256
      %32 = vsyncadd [#allocation6], %s31
      %s33 = sshll.u32 [#allocation5], 4
      %s34 = int_to_ptr.vmem [resolvable:$true] %s33
      %39 = dma.hbm_to_vmem [thread:$0]  %s1, 256, %s34, [#allocation6], 64, 64, 4
    $region9: #{tpu_custom_call.1} parent=1 // pred_fallthru
      _
    // Predicated region
    $region10: #{tpu_custom_call.1} parent=1 // pred_check
      _
    $region11: #{tpu_custom_call.1} parent=1 // pred_check_branch
      %41 = sbr.rel (0) target = $region13
    $region12: #{tpu_custom_call.1} parent=1 // pred_region
      _
    $region13: #{tpu_custom_call.1} parent=1 // pred_fallthru
      _
    // Predicated region
    $region14: #{tpu_custom_call.1} parent=1 // pred_check
      _
    $region15: #{tpu_custom_call.1} parent=1 // pred_check_branch
      %43 = sbr.rel (0) target = $region17
    $region16: #{tpu_custom_call.1} parent=1 // pred_region
      %s45 = ssub.s32 1024, 1024
      %46 = vsyncadd [#allocation6], %s45
      %s47 = sshll.u32 [#allocation7], 4
      %s48 = int_to_ptr.vmem [resolvable:$true] %s47
      %53 = dma.hbm_to_vmem [thread:$0]  %s3, 1024, %s48, [#allocation6], 64, 64, 4
    $region17: #{tpu_custom_call.1} parent=1 // pred_fallthru
      _
    // Predicated region
    $region18: #{tpu_custom_call.1} parent=1 // pred_check
      _
    $region19: #{tpu_custom_call.1} parent=1 // pred_check_branch
      %55 = sbr.rel (0) target = $region21
    $region20: #{tpu_custom_call.1} parent=1 // pred_region
      _
    $region21: #{tpu_custom_call.1} parent=1 // pred_fallthru
      _
    // Predicated region
    $region22: #{tpu_custom_call.1} parent=1 // pred_check
      _
    $region23: #{tpu_custom_call.1} parent=1 // pred_check_branch
      %57 = sbr.rel (0) target = $region25
    $region24: #{tpu_custom_call.1} parent=1 // pred_region
      %58 = dma.done [#allocation3], 256
    $region25: #{tpu_custom_call.1} parent=1 // pred_fallthru
      _
    // Predicated region
    $region26: #{tpu_custom_call.1} parent=1 // pred_check
      _
    $region27: #{tpu_custom_call.1} parent=1 // pred_check_branch
      %60 = sbr.rel (0) target = $region29
    $region28: #{tpu_custom_call.1} parent=1 // pred_region
      %61 = dma.done [#allocation6], 256
    $region29: #{tpu_custom_call.1} parent=1 // pred_fallthru
      _
    // Predicated region
    $region30: #{tpu_custom_call.1} parent=1 // pred_check
      _
    $region31: #{tpu_custom_call.1} parent=1 // pred_check_branch
      %63 = sbr.rel (0) target = $region33
    $region32: #{tpu_custom_call.1} parent=1 // pred_region
      %64 = dma.done [#allocation6], 1024
    $region33: #{tpu_custom_call.1} parent=1 // pred_fallthru
      _
    %v66 = vld [vmem:[#allocation2] sm:$0xff]
    %v67 = vld [vmem:[#allocation2 + $0x8] sm:$0xff]
    %v68 = vpack.c.bf16 %v67, %v66
    %v69 = vld [vmem:[#allocation5] sm:$0xf]
    %v70 = vld [vmem:[#allocation5 + $0x4] sm:$0xf]
    %v71 = vld [vmem:[#allocation5 + $0x8] sm:$0xf]
    %v72 = vld [vmem:[#allocation5 + $0xc] sm:$0xf]
    %v73 = vld [vmem:[%s2] sm:$0x1]
    %v75 = vlaneseq
    %v76 = vshrl.u32 %v75, 7
    %v77 = vsub.s32 0, %v76
    %v78 = vrot.slane %v73, %v77
    %v84 = vunpack.c.l.b16 %v69
    %v85 = vunpack.c.l.b16 %v70
    %v86 = vunpack.c.l.b16 %v71
    %v87 = vunpack.c.l.b16 %v72
    %v88 = vpack.c.b16 %v85, %v84
    %v89 = vpack.c.b16 %v87, %v86
    %vm92 = vcmask 261120
    %v94 = vsel %vm92, %v68, 0
    %96 = vmatprep.subr.bf16.mxu0 0
    %97 = vmatpush1.bf16.msra.mxu0 %v88
    %98 = vmatprep.subr.bf16.mxu0 0
    %99 = vmatpush1.bf16.msra.mxu0 %v89
    %100 = vmatprep.subr.bf16.mxu0 0
    %101 = vmatpush1.bf16.msra.mxu0 0
    %102 = vmatprep.subr.bf16.mxu0 0
    %103 = vmatpush1.bf16.msra.mxu0 0
    %104 = vmatprep.subr.bf16.mxu0 0
    %105 = vmatpush1.bf16.msra.mxu0 0
    %106 = vmatprep.subr.bf16.mxu0 0
    %107 = vmatpush1.bf16.msra.mxu0 0
    %108 = vmatprep.subr.bf16.mxu0 0
    %109 = vmatpush1.bf16.msra.mxu0 0
    %110 = vmatprep.subr.bf16.mxu0 0
    %111 = vmatpush1.bf16.msra.mxu0 0
    %112 = vmatprep.subr.bf16.mxu0 0
    %113 = vmatpush1.bf16.msra.mxu0 0
    %114 = vmatprep.subr.bf16.mxu0 0
    %115 = vmatpush1.bf16.msra.mxu0 0
    %116 = vmatprep.subr.bf16.mxu0 0
    %117 = vmatpush1.bf16.msra.mxu0 0
    %118 = vmatprep.subr.bf16.mxu0 0
    %119 = vmatpush1.bf16.msra.mxu0 0
    %120 = vmatprep.subr.bf16.mxu0 0
    %121 = vmatpush1.bf16.msra.mxu0 0
    %122 = vmatprep.subr.bf16.mxu0 0
    %123 = vmatpush1.bf16.msra.mxu0 0
    %124 = vmatprep.subr.bf16.mxu0 0
    %125 = vmatpush1.bf16.msra.mxu0 0
    %126 = vmatprep.subr.bf16.mxu0 0
    %127 = vmatpush1.bf16.msra.mxu0 0
    %128 = vmatprep.mubr.bf16.mxu0 0
    %129 = vmatmul.mubr.bf16.gmra.mrb[0].mxu0 %v94
    %v130 = vpop.f32.mrb[0].mxu0
    %v131 = vadd.f32 %v78, %v130
    %v132 = vpop.f32.mrb[0].mxu0
    %v133 = vpop.f32.mrb[0].mxu0
    %v134 = vadd.f32 %v78, %v133
    %v135 = vpop.f32.mrb[0].mxu0
    %136 = vdwg.mxu0
    %v137 = vmax.f32 %v131, 0.0
    %v138 = vmax.f32 %v134, 0.0
    %v139 = vpack.c.bf16 %v138, %v137
    %v141 = vunpack.c.l.b16 %v139
    %v142 = vunpack.c.h.b16 %v139
    %v143 = vpack.c.b16 %v141, %v141
    %v144 = vpack.c.b16 %v142, %v142
    %147 = vst [vmem:[#allocation9] sm:$0xf] %v143
    %148 = vst [vmem:[#allocation9 + $0x4] sm:$0xf] %v144
    %v149 = vld [vmem:[#allocation7] sm:$0xf]
    %v150 = vld [vmem:[#allocation7 + $0x4] sm:$0xf]
    %v151 = vld [vmem:[#allocation7 + $0x8] sm:$0xf]
    %v152 = vld [vmem:[#allocation7 + $0xc] sm:$0xf]
    %v153 = vld [vmem:[#allocation7 + $0x10] sm:$0xf]
    %v154 = vld [vmem:[#allocation7 + $0x14] sm:$0xf]
    %v155 = vld [vmem:[#allocation7 + $0x18] sm:$0xf]
    %v156 = vld [vmem:[#allocation7 + $0x1c] sm:$0xf]
    %v157 = vld [vmem:[#allocation7 + $0x20] sm:$0xf]
    %v158 = vld [vmem:[#allocation7 + $0x24] sm:$0xf]
    %v159 = vld [vmem:[#allocation7 + $0x28] sm:$0xf]
    %v160 = vld [vmem:[#allocation7 + $0x2c] sm:$0xf]
    %v161 = vld [vmem:[#allocation7 + $0x30] sm:$0xf]
    %v162 = vld [vmem:[#allocation7 + $0x34] sm:$0xf]
    %v163 = vld [vmem:[#allocation7 + $0x38] sm:$0xf]
    %v164 = vld [vmem:[#allocation7 + $0x3c] sm:$0xf]
    %v165 = vld [vmem:[%s4] sm:$0x1]
    %v167 = vlaneseq
    %v168 = vshrl.u32 %v167, 7
    %v169 = vsub.s32 0, %v168
    %v170 = vrot.slane %v165, %v169
    %v188 = vunpack.c.l.b16 %v149
    %v189 = vunpack.c.l.b16 %v150
    %v190 = vunpack.c.l.b16 %v151
    %v191 = vunpack.c.l.b16 %v152
    %v192 = vunpack.c.l.b16 %v153
    %v193 = vunpack.c.l.b16 %v154
    %v194 = vunpack.c.l.b16 %v155
    %v195 = vunpack.c.l.b16 %v156
    %v196 = vunpack.c.l.b16 %v157
    %v197 = vunpack.c.l.b16 %v158
    %v198 = vunpack.c.l.b16 %v159
    %v199 = vunpack.c.l.b16 %v160
    %v200 = vunpack.c.l.b16 %v161
    %v201 = vunpack.c.l.b16 %v162
    %v202 = vunpack.c.l.b16 %v163
    %v203 = vunpack.c.l.b16 %v164
    %v204 = vpack.c.b16 %v189, %v188
    %v205 = vpack.c.b16 %v191, %v190
    %v206 = vpack.c.b16 %v193, %v192
    %v207 = vpack.c.b16 %v195, %v194
    %v208 = vpack.c.b16 %v197, %v196
    %v209 = vpack.c.b16 %v199, %v198
    %v210 = vpack.c.b16 %v201, %v200
    %v211 = vpack.c.b16 %v203, %v202
    %220 = vmatprep.subr.bf16.mxu0 0
    %221 = vmatpush1.bf16.msra.mxu0 %v204
    %222 = vmatprep.subr.bf16.mxu0 0
    %223 = vmatpush1.bf16.msra.mxu0 %v205
    %224 = vmatprep.subr.bf16.mxu0 0
    %225 = vmatpush1.bf16.msra.mxu0 %v206
    %226 = vmatprep.subr.bf16.mxu0 0
    %227 = vmatpush1.bf16.msra.mxu0 %v207
    %228 = vmatprep.subr.bf16.mxu0 0
    %229 = vmatpush1.bf16.msra.mxu0 %v208
    %230 = vmatprep.subr.bf16.mxu0 0
    %231 = vmatpush1.bf16.msra.mxu0 %v209
    %232 = vmatprep.subr.bf16.mxu0 0
    %233 = vmatpush1.bf16.msra.mxu0 %v210
    %234 = vmatprep.subr.bf16.mxu0 0
    %235 = vmatpush1.bf16.msra.mxu0 %v211
    %236 = vmatprep.subr.bf16.mxu0 0
    %237 = vmatpush1.bf16.msra.mxu0 0
    %238 = vmatprep.subr.bf16.mxu0 0
    %239 = vmatpush1.bf16.msra.mxu0 0
    %240 = vmatprep.subr.bf16.mxu0 0
    %241 = vmatpush1.bf16.msra.mxu0 0
    %242 = vmatprep.subr.bf16.mxu0 0
    %243 = vmatpush1.bf16.msra.mxu0 0
    %244 = vmatprep.subr.bf16.mxu0 0
    %245 = vmatpush1.bf16.msra.mxu0 0
    %246 = vmatprep.subr.bf16.mxu0 0
    %247 = vmatpush1.bf16.msra.mxu0 0
    %248 = vmatprep.subr.bf16.mxu0 0
    %249 = vmatpush1.bf16.msra.mxu0 0
    %250 = vmatprep.subr.bf16.mxu0 0
    %251 = vmatpush1.bf16.msra.mxu0 0
    %252 = vmatprep.mubr.bf16.mxu0 0
    %253 = vmatmul.mubr.bf16.gmra.mrb[0].mxu0 %v139
    %v254 = vpop.f32.mrb[0].mxu0
    %v255 = vadd.f32 %v170, %v254
    %v256 = vpop.f32.mrb[0].mxu0
    %v257 = vpop.f32.mrb[0].mxu0
    %v258 = vadd.f32 %v170, %v257
    %v259 = vpop.f32.mrb[0].mxu0
    %260 = vdwg.mxu0
    %261 = vst [vmem:[#allocation8] sm:$0xff] %v255
    %262 = vst [vmem:[#allocation8 + $0x8] sm:$0xff] %v258
    // Predicated region
    $region34: #{tpu_custom_call.1} parent=1 // pred_check
      _
    $region35: #{tpu_custom_call.1} parent=1 // pred_check_branch
      %264 = sbr.rel (0) target = $region37
    $region36: #{tpu_custom_call.1} parent=1 // pred_region
      %s266 = ssub.s32 256, 256
      %267 = vsyncadd [#allocation4], %s266
      %s268 = sshll.u32 [#allocation8], 4
      %s269 = int_to_ptr.vmem [resolvable:$true] %s268
      %274 = dma.vmem_to_hbm [thread:$0]  %s269, 256, %s5, [#allocation4], 128, 128, 8
    $region37: #{tpu_custom_call.1} parent=1 // pred_fallthru
      _
    // Predicated region
    $region38: #{tpu_custom_call.1} parent=1 // pred_check
      _
    $region39: #{tpu_custom_call.1} parent=1 // pred_check_branch
      %276 = sbr.rel (0) target = $region41
    $region40: #{tpu_custom_call.1} parent=1 // pred_region
      %s278 = ssub.s32 128, 128
      %279 = vsyncadd [#allocation10], %s278
      %s280 = sshll.u32 [#allocation9], 4
      %s281 = int_to_ptr.vmem [resolvable:$true] %s280
      %286 = dma.vmem_to_hbm [thread:$0]  %s281, 128, %s6, [#allocation10], 64, 64, 4
    $region41: #{tpu_custom_call.1} parent=1 // pred_fallthru
      _
    // Predicated region
    $region42: #{tpu_custom_call.1} parent=1 // pred_check
      _
    $region43: #{tpu_custom_call.1} parent=1 // pred_check_branch
      %288 = sbr.rel (0) target = $region45
    $region44: #{tpu_custom_call.1} parent=1 // pred_region
      %289 = dma.done [#allocation4], 256
    $region45: #{tpu_custom_call.1} parent=1 // pred_fallthru
      _
    // Predicated region
    $region46: #{tpu_custom_call.1} parent=1 // pred_check
      _
    $region47: #{tpu_custom_call.1} parent=1 // pred_check_branch
      %291 = sbr.rel (0) target = $region49
    $region48: #{tpu_custom_call.1} parent=1 // pred_region
      %292 = dma.done [#allocation10], 128
    $region49: #{tpu_custom_call.1} parent=1 // pred_fallthru
      _
    %293 = vsyncpa [#allocation3], 1
    %294 = vsyncpa [#allocation6], 1
    %295 = vsyncpa [#allocation4], 1
    %296 = vsyncpa [#allocation10], 1

</llo_original>
